<compile_context>
chip_gen: v7x
topology: tpu7x:2x2x1
jax: 0.10.0
libtpu: 0.0.40
codegen_flags: <defaults>
</compile_context>

<pallas_src>
import jax
import jax.numpy as jnp
import numpy as np
from jax.experimental import pallas as pl
from jax.experimental.pallas import tpu as pltpu


_BLOCK_BUDGET = 8 * 1024 * 1024  # bytes for ONE edge-feature block (x2 when double-buffered)


def _round_up(x, m):
    return -(-x // m) * m


def _auto_tiles(G, E, F, itemsize):
    """Pick (tg, te) so the edge-feature block ~fills _BLOCK_BUDGET (v7x-safe)."""
    sub = {4: 8, 2: 16, 1: 32}.get(itemsize, 8)   # sublane granularity per dtype
    row = F * itemsize                            # bytes per edge row

    # Edge tile: collapse the whole edge axis when even the minimum graph tile
    # (8 graphs) fits the budget -> single edge step, no accumulator RMW.
    if 8 * E * row <= _BLOCK_BUDGET:
        te = E
    else:
        te = max(sub, (_BLOCK_BUDGET // (8 * row)) // sub * sub)

    # Graph tile: fill the budget, multiple of 8 (output/counts alignment), and
    # keep >= 2 graph blocks when G allows so both v7x TensorCores get work.
    tg = max(8, (_BLOCK_BUDGET // max(1, te * row)) // 8 * 8)
    tg = min(tg, _round_up(G, 8))
    if G > 8:
        tg = min(tg, _round_up((G + 1) // 2, 8))
    return tg, te


def _edge_readout_kernel(counts_ref, x_ref, w_ref, b_ref, out_ref, sum_acc, max_acc):
    te_i = pl.program_id(1)
    TG, TE, F = x_ref.shape

    # ---- init accumulators on first edge-tile -------------------------------
    @pl.when(te_i == 0)
    def _():
        sum_acc[...] = jnp.zeros_like(sum_acc)
        max_acc[...] = jnp.full_like(max_acc, -jnp.inf)

    x = x_ref[...].astype(jnp.float32)               # (TG, TE, F) upcast in-kernel (bf16 ok)
    w = w_ref[...]                                   # (1, F) f32, lane-dense
    b = b_ref[0, 0]                                  # scalar from SMEM

    # per-edge weight: tanh(x @ W^T + b) via VPU mul + lane reduction + EUP tanh
    ew = jnp.tanh(jnp.sum(x * w, axis=-1, keepdims=True) + b)       # (TG, TE, 1)

    # valid-edge mask: global edge index < per-graph edge count.
    # NOTE: masking happens AFTER the multiplies so garbage in ragged/padded
    # rows (incl. NaN/Inf) never reaches the accumulators.
    cnt = counts_ref[...]                                           # (TG, 1) i32
    eidx = jax.lax.broadcasted_iota(jnp.int32, (1, TE, 1), 1) + te_i * TE
    mask = eidx < cnt[:, :, None]                                   # (TG, TE, 1)

    weighted = jnp.where(mask, x * ew, 0.0)
    sum_acc[...] += jnp.sum(weighted, axis=1)                       # (TG, F)

    masked_x = jnp.where(mask, x, -jnp.inf)
    max_acc[...] = jnp.maximum(max_acc[...], jnp.max(masked_x, axis=1))

    # ---- finalize on last edge-tile: one lane-contiguous store ---------------
    @pl.when(te_i == pl.num_programs(1) - 1)
    def _():
        h_max = jnp.where(cnt > 0, max_acc[...], 0.0)               # zero-edge graphs -> 0
        out_ref[...] = jnp.concatenate([sum_acc[...], h_max], axis=-1).astype(out_ref.dtype)


def edge_weighted_sum_and_max(edge_feats, counts, weight, bias, *, tg=None, te=None):
    """edge_feats: [G, E, F] (f32 or bf16), counts: [G] i32 (counts[g] <= E),
    weight: [1, F], bias: [1]. Returns [G, 2F] f32."""
    G, E, F = edge_feats.shape
    itemsize = jnp.dtype(edge_feats.dtype).itemsize

    a_tg, a_te = _auto_tiles(G, E, F, itemsize)
    tg = a_tg if tg is None else tg
    te = a_te if te is None else te

    grid = (pl.cdiv(G, tg), pl.cdiv(E, te))
    Gp = grid[0] * tg

    # Only the tiny per-graph count vector is padded (keeps every counts block
    # in-bounds and padded graphs masked with count=0). The big [G,E,F] tensor
    # streams as-is: ragged last blocks read unspecified values that stay behind
    # the count mask, and out-of-bounds output rows are dropped.
    cnt = jnp.pad(counts.astype(jnp.int32), (0, Gp - G)).reshape(Gp, 1)
    w = weight.reshape(1, F).astype(jnp.float32)        # lane-dense (1, F)
    b = bias.reshape(1, 1).astype(jnp.float32)          # scalar -> SMEM

    # Explicit VMEM budget: sized for v7x (64 MiB physical); also lifts the
    # 16/32 MiB scoped defaults on v5e/v6e when blocks are large.
    x_block = tg * te * F * itemsize
    out_block = tg * max(2 * F, 128) * 4
    scratch_bytes = 2 * tg * max(F, 128) * 4
    est = 2 * x_block + 2 * out_block + scratch_bytes + (1 << 20)
    vmem_limit = int(min(max(int(est * 1.5), 32 << 20), 56 << 20))

    out = pl.pallas_call(
        _edge_readout_kernel,
        out_shape=jax.ShapeDtypeStruct((G, 2 * F), jnp.float32),
        grid_spec=pltpu.PrefetchScalarGridSpec(
            num_scalar_prefetch=0,
            grid=grid,
            in_specs=[
                pl.BlockSpec((tg, 1), lambda gb, ti: (gb, 0)),           # edge counts
                pl.BlockSpec((tg, te, F), lambda gb, ti: (gb, ti, 0)),   # edge features
                pl.BlockSpec((1, F), lambda gb, ti: (0, 0)),             # linear weight
                pl.BlockSpec(memory_space=pltpu.MemorySpace.SMEM),       # linear bias (scalar)
            ],
            out_specs=pl.BlockSpec((tg, 2 * F), lambda gb, ti: (gb, 0)),
            scratch_shapes=[
                pltpu.VMEM((tg, F), jnp.float32),    # running weighted sum
                pltpu.VMEM((tg, F), jnp.float32),    # running max
            ],
        ),
        compiler_params=pltpu.CompilerParams(
            dimension_semantics=("parallel", "arbitrary"),
            vmem_limit_bytes=vmem_limit,
        ),
    )(cnt, x, w, b) if False else pl.pallas_call(      # (kept single call path below)
        _edge_readout_kernel,
        out_shape=jax.ShapeDtypeStruct((G, 2 * F), jnp.float32),
        grid_spec=pltpu.PrefetchScalarGridSpec(
            num_scalar_prefetch=0,
            grid=grid,
            in_specs=[
                pl.BlockSpec((tg, 1), lambda gb, ti: (gb, 0)),
                pl.BlockSpec((tg, te, F), lambda gb, ti: (gb, ti, 0)),
                pl.BlockSpec((1, F), lambda gb, ti: (0, 0)),
                pl.BlockSpec(memory_space=pltpu.MemorySpace.SMEM),
            ],
            out_specs=pl.BlockSpec((tg, 2 * F), lambda gb, ti: (gb, 0)),
            scratch_shapes=[
                pltpu.VMEM((tg, F), jnp.float32),
                pltpu.VMEM((tg, F), jnp.float32),
            ],
        ),
        compiler_params=pltpu.CompilerParams(
            dimension_semantics=("parallel", "arbitrary"),
            vmem_limit_bytes=vmem_limit,
        ),
    )(cnt, edge_feats, w, b)
    return out


def reference(edge_feats, counts, weight, bias):
    G, E, F = edge_feats.shape
    x = edge_feats.astype(jnp.float32)
    eidx = jnp.arange(E)[None, :, None]                      # (1, E, 1)
    mask = eidx < counts[:, None, None]                      # (G, E, 1)
    ew = jnp.tanh(x @ weight.astype(jnp.float32).T + bias.astype(jnp.float32))
    h_sum = jnp.sum(jnp.where(mask, x * ew, 0.0), axis=1)
    h_max = jnp.max(jnp.where(mask, x, -jnp.inf), axis=1)
    h_max = jnp.where(counts[:, None] > 0, h_max, 0.0)
    return jnp.concatenate([h_sum, h_max], axis=1)


if __name__ == "__main__":
    in_feats = 32
    key = jax.random.PRNGKey(0)
    k_e, k_w, k_b, k_e2 = jax.random.split(key, 4)

    # deterministic "Linear(in_feats, 1)" parameters (synthetic, no checkpoint)
    weight = jax.random.normal(k_w, (1, in_feats), dtype=jnp.float32) * 0.1
    bias = jax.random.normal(k_b, (1,), dtype=jnp.float32) * 0.1

    # --- test 1: tile-aligned shapes, single edge step ------------------------
    G, E_max = 16, 16
    counts = jnp.array([16, 5, 0, 8, 3, 16, 1, 7, 12, 4, 9, 0, 16, 2, 6, 10],
                       dtype=jnp.int32)
    edge_feats = jax.random.normal(k_e, (G, E_max, in_feats), dtype=jnp.float32)

    out = jax.block_until_ready(edge_weighted_sum_and_max(edge_feats, counts, weight, bias))
    ref = reference(edge_feats, counts, weight, bias)
    np.testing.assert_allclose(np.asarray(out), np.asarray(ref), rtol=1e-5, atol=1e-5)

    # --- test 2: ragged grid (G, E not multiples of the tile) + multi-step edge axis
    G2, E2 = 13, 50
    counts2 = jnp.array([50, 17, 0, 33, 8, 50, 1, 26, 49, 5, 12, 0, 40], dtype=jnp.int32)
    edge_feats2 = jax.random.normal(k_e2, (G2, E2, in_feats), dtype=jnp.float32)

    out2 = jax.block_until_ready(
        edge_weighted_sum_and_max(edge_feats2, counts2, weight, bias, te=16))
    ref2 = reference(edge_feats2, counts2, weight, bias)
    np.testing.assert_allclose(np.asarray(out2), np.asarray(ref2), rtol=1e-5, atol=1e-5)

    print("KERNEL_OK")
</pallas_src>

<mosaic_0001>
module attributes {stable_mosaic.version = 11 : i64} {
  func.func @_edge_readout_kernel(%arg0: i32, %arg1: i32, %arg2: memref<8x1xi32, #tpu.memory_space<vmem>>, %arg3: memref<8x16x32xf32, #tpu.memory_space<vmem>>, %arg4: memref<1x32xf32, #tpu.memory_space<vmem>>, %arg5: memref<1x1xf32, #tpu.memory_space<smem>>, %arg6: memref<8x64xf32, #tpu.memory_space<vmem>>, %arg7: memref<8x32xf32, #tpu.memory_space<vmem>>, %arg8: memref<8x32xf32, #tpu.memory_space<vmem>>) attributes {dimension_semantics = [#tpu.dimension_semantics<parallel>, #tpu.dimension_semantics<arbitrary>], iteration_bounds = array<i64: 2, 1>, scalar_prefetch = 0 : i64, scratch_operands = 2 : i64, tpu.core_type = #tpu.core_type<tc>, window_params = [{transform_indices = @transform_0, window_bounds = array<i64: 8, 1>}, {transform_indices = @transform_1, window_bounds = array<i64: 8, 16, 32>}, {pipeline_mode = #tpu.pipeline_mode<synchronous>, transform_indices = @transform_2, window_bounds = array<i64: 1, 32>}, {transform_indices = @transform_3, window_bounds = array<i64: 1, 1>}, {transform_indices = @transform_4, window_bounds = array<i64: 8, 64>}]} {
    %c0_i32 = arith.constant 0 : i32
    %0 = arith.cmpi eq, %arg1, %c0_i32 : i32
    %1 = arith.extui %0 : i1 to i32
    %c0_i32_0 = arith.constant 0 : i32
    %2 = arith.cmpi ne, %1, %c0_i32_0 : i32
    scf.if %2 {
      %cst_23 = arith.constant 0.000000e+00 : f32
      %44 = vector.broadcast %cst_23 : f32 to vector<8x32xf32>
      %c0_24 = arith.constant 0 : index
      %c0_25 = arith.constant 0 : index
      %45 = vector.load %arg7[%c0_24, %c0_25] : memref<8x32xf32, #tpu.memory_space<vmem>>, vector<8x32xf32>
      tpu.vector_store %arg7[%c0_24, %c0_25], %44 {strides = array<i32>} : memref<8x32xf32, #tpu.memory_space<vmem>>, vector<8x32xf32>,
      %cst_26 = arith.constant 0xFF800000 : f32
      %46 = vector.broadcast %cst_26 : f32 to vector<8x32xf32>
      %c0_27 = arith.constant 0 : index
      %c0_28 = arith.constant 0 : index
      %47 = vector.load %arg8[%c0_27, %c0_28] : memref<8x32xf32, #tpu.memory_space<vmem>>, vector<8x32xf32>
      tpu.vector_store %arg8[%c0_27, %c0_28], %46 {strides = array<i32>} : memref<8x32xf32, #tpu.memory_space<vmem>>, vector<8x32xf32>,
    } else {
    }
    %c0 = arith.constant 0 : index
    %c0_1 = arith.constant 0 : index
    %c0_2 = arith.constant 0 : index
    %3 = vector.load %arg3[%c0, %c0_1, %c0_2] : memref<8x16x32xf32, #tpu.memory_space<vmem>>, vector<8x16x32xf32>
    %c0_3 = arith.constant 0 : index
    %c0_4 = arith.constant 0 : index
    %4 = vector.load %arg4[%c0_3, %c0_4] : memref<1x32xf32, #tpu.memory_space<vmem>>, vector<1x32xf32>
    %c0_5 = arith.constant 0 : index
    %c0_6 = arith.constant 0 : index
    %5 = memref.load %arg5[%c0_5, %c0_6] : memref<1x1xf32, #tpu.memory_space<smem>>
    %6 = vector.shape_cast %4 : vector<1x32xf32> to vector<1x1x32xf32>
    %7 = vector.broadcast %6 : vector<1x1x32xf32> to vector<8x16x32xf32>
    %8 = arith.mulf %3, %7 : vector<8x16x32xf32>
    %cst = arith.constant dense<0.000000e+00> : vector<8x16xf32>
    %9 = vector.multi_reduction <add>, %8, %cst [2] : vector<8x16x32xf32> to vector<8x16xf32>
    %10 = vector.shape_cast %9 : vector<8x16xf32> to vector<8x16x1xf32>
    %11 = vector.broadcast %5 : f32 to vector<8x16x1xf32>
    %12 = arith.addf %10, %11 : vector<8x16x1xf32>
    %13 = math.tanh %12 : vector<8x16x1xf32>
    %c0_7 = arith.constant 0 : index
    %c0_8 = arith.constant 0 : index
    %14 = vector.load %arg2[%c0_7, %c0_8] : memref<8x1xi32, #tpu.memory_space<vmem>>, vector<8x1xi32>
    %15 = tpu.iota {dimensions = array<i32: 1>} : vector<1x16x1xi32>
    %c16_i32 = arith.constant 16 : i32
    %16 = arith.muli %arg1, %c16_i32 : i32
    %17 = vector.broadcast %16 : i32 to vector<1x16x1xi32>
    %18 = arith.addi %15, %17 : vector<1x16x1xi32>
    %19 = vector.shape_cast %14 : vector<8x1xi32> to vector<8x1x1xi32>
    %20 = vector.broadcast %18 : vector<1x16x1xi32> to vector<8x16x1xi32>
    %21 = vector.broadcast %19 : vector<8x1x1xi32> to vector<8x16x1xi32>
    %22 = arith.cmpi slt, %20, %21 : vector<8x16x1xi32>
    %23 = vector.broadcast %13 : vector<8x16x1xf32> to vector<8x16x32xf32>
    %24 = arith.mulf %3, %23 : vector<8x16x32xf32>
    %cst_9 = arith.constant 0.000000e+00 : f32
    %25 = vector.shape_cast %22 : vector<8x16x1xi1> to vector<8x16x1xi1>
    %26 = vector.broadcast %25 : vector<8x16x1xi1> to vector<8x16x32xi1>
    %27 = vector.broadcast %cst_9 : f32 to vector<8x16x32xf32>
    %28 = arith.select %26, %24, %27 : vector<8x16x32xi1>, vector<8x16x32xf32>
    %c0_10 = arith.constant 0 : index
    %c0_11 = arith.constant 0 : index
    %29 = vector.load %arg7[%c0_10, %c0_11] : memref<8x32xf32, #tpu.memory_space<vmem>>, vector<8x32xf32>
    %cst_12 = arith.constant dense<0.000000e+00> : vector<8x32xf32>
    %30 = vector.multi_reduction <add>, %28, %cst_12 [1] : vector<8x16x32xf32> to vector<8x32xf32>
    %31 = arith.addf %29, %30 : vector<8x32xf32>
    %c0_13 = arith.constant 0 : index
    %c0_14 = arith.constant 0 : index
    %32 = vector.load %arg7[%c0_13, %c0_14] : memref<8x32xf32, #tpu.memory_space<vmem>>, vector<8x32xf32>
    tpu.vector_store %arg7[%c0_13, %c0_14], %31 {strides = array<i32>} : memref<8x32xf32, #tpu.memory_space<vmem>>, vector<8x32xf32>,
    %cst_15 = arith.constant 0xFF800000 : f32
    %33 = vector.shape_cast %22 : vector<8x16x1xi1> to vector<8x16x1xi1>
    %34 = vector.broadcast %33 : vector<8x16x1xi1> to vector<8x16x32xi1>
    %35 = vector.broadcast %cst_15 : f32 to vector<8x16x32xf32>
    %36 = arith.select %34, %3, %35 : vector<8x16x32xi1>, vector<8x16x32xf32>
    %c0_16 = arith.constant 0 : index
    %c0_17 = arith.constant 0 : index
    %37 = vector.load %arg8[%c0_16, %c0_17] : memref<8x32xf32, #tpu.memory_space<vmem>>, vector<8x32xf32>
    %cst_18 = arith.constant dense<0xFF800000> : vector<8x32xf32>
    %38 = vector.multi_reduction <maximumf>, %36, %cst_18 [1] : vector<8x16x32xf32> to vector<8x32xf32>
    %39 = arith.maximumf %37, %38 : vector<8x32xf32>
    %c0_19 = arith.constant 0 : index
    %c0_20 = arith.constant 0 : index
    %40 = vector.load %arg8[%c0_19, %c0_20] : memref<8x32xf32, #tpu.memory_space<vmem>>, vector<8x32xf32>
    tpu.vector_store %arg8[%c0_19, %c0_20], %39 {strides = array<i32>} : memref<8x32xf32, #tpu.memory_space<vmem>>, vector<8x32xf32>,
    %c0_i32_21 = arith.constant 0 : i32
    %41 = arith.cmpi eq, %arg1, %c0_i32_21 : i32
    %42 = arith.extui %41 : i1 to i32
    %c0_i32_22 = arith.constant 0 : i32
    %43 = arith.cmpi ne, %42, %c0_i32_22 : i32
    scf.if %43 {
      %c0_i32_23 = arith.constant 0 : i32
      %44 = vector.broadcast %c0_i32_23 : i32 to vector<8x1xi32>
      %45 = arith.cmpi sgt, %14, %44 : vector<8x1xi32>
      %c0_24 = arith.constant 0 : index
      %c0_25 = arith.constant 0 : index
      %46 = vector.load %arg8[%c0_24, %c0_25] : memref<8x32xf32, #tpu.memory_space<vmem>>, vector<8x32xf32>
      %cst_26 = arith.constant 0.000000e+00 : f32
      %47 = vector.shape_cast %45 : vector<8x1xi1> to vector<8x1xi1>
      %48 = vector.broadcast %47 : vector<8x1xi1> to vector<8x32xi1>
      %49 = vector.broadcast %cst_26 : f32 to vector<8x32xf32>
      %50 = arith.select %48, %46, %49 : vector<8x32xi1>, vector<8x32xf32>
      %c0_27 = arith.constant 0 : index
      %c0_28 = arith.constant 0 : index
      %51 = vector.load %arg7[%c0_27, %c0_28] : memref<8x32xf32, #tpu.memory_space<vmem>>, vector<8x32xf32>
      %52 = tpu.concatenate %51, %50 in 1 : vector<8x32xf32>, vector<8x32xf32> -> vector<8x64xf32>
      %c0_29 = arith.constant 0 : index
      %c0_30 = arith.constant 0 : index
      %53 = vector.load %arg6[%c0_29, %c0_30] : memref<8x64xf32, #tpu.memory_space<vmem>>, vector<8x64xf32>
      tpu.vector_store %arg6[%c0_29, %c0_30], %52 {strides = array<i32>} : memref<8x64xf32, #tpu.memory_space<vmem>>, vector<8x64xf32>,
    } else {
    }
    return
  }
  func.func @transform_0(%arg0: i32, %arg1: i32) -> (i32, i32) {
    %c0_i32 = arith.constant 0 : i32
    %c0_i32_0 = arith.constant 0 : i32
    return %arg0, %c0_i32 : i32, i32
  }
  func.func @transform_1(%arg0: i32, %arg1: i32) -> (i32, i32, i32) {
    %c0_i32 = arith.constant 0 : i32
    %c0_i32_0 = arith.constant 0 : i32
    return %arg0, %arg1, %c0_i32 : i32, i32, i32
  }
  func.func @transform_2(%arg0: i32, %arg1: i32) -> (i32, i32) {
    %c0_i32 = arith.constant 0 : i32
    %c0_i32_0 = arith.constant 0 : i32
    %c0_i32_1 = arith.constant 0 : i32
    return %c0_i32, %c0_i32_0 : i32, i32
  }
  func.func @transform_3(%arg0: i32, %arg1: i32) -> (i32, i32) {
    %c0_i32 = arith.constant 0 : i32
    %c0_i32_0 = arith.constant 0 : i32
    %c0_i32_1 = arith.constant 0 : i32
    return %c0_i32, %c0_i32_0 : i32, i32
  }
  func.func @transform_4(%arg0: i32, %arg1: i32) -> (i32, i32) {
    %c0_i32 = arith.constant 0 : i32
    %c0_i32_0 = arith.constant 0 : i32
    return %arg0, %c0_i32 : i32, i32
  }
}

</mosaic_0001>

<llo_original>
// kernel: tpu_custom_call.1
$region0: #{tpu_custom_call.1}
  #allocation0 [shape = 'u32[]', space=smem, size = 0x4, offset = 0x4, fixed_abs, tag = 'smem constant byte address 0x4 - core index']
  #allocation1 [shape = 'u32[144,128]{1,0:T(1,128)}', space=vmem, size = 0x12000, scoped, tag = 'internal scratch']
  #allocation2 [shape = 'f32[8,32]{1,0:T(8,128)}', space=vmem, size = 0x1000, scoped, tag = 'scratch operand']
  #allocation3 [shape = 'f32[8,32]{1,0:T(8,128)}', space=vmem, size = 0x1000, scoped, tag = 'scratch operand']
  #allocation4 [shape = 'f32[1,1]{1,0:T(1,128)S(6)}', space=smem, size = 0x200, scoped, tag = 'scoped memory for tpu_custom_call.1']
  %s0 = inlined_call_operand.vmem [shape: s32[16,1], index: 0, kind: input, shape index: {}]
  %s1 = inlined_call_operand.hbm [shape: f32[16,16,32], index: 1, kind: input, shape index: {}]
  %s2 = inlined_call_operand.vmem [shape: f32[1,32], index: 2, kind: input, shape index: {}]
  %s3 = inlined_call_operand.<no memory space> [shape: f32[1,1], index: 3, kind: input, shape index: {}]
  %s4 = inlined_call_operand.hbm [shape: f32[16,64], index: 4, kind: output, shape index: {}]
  %s5 = sld [smem:[#allocation0]]
  $region61: #{tpu_custom_call.1} parent=0
    _
  %s7 = ssub.s32 1, %s5
  %s8 = scalar_select 0, %s7, %s5
  %9 = sst [smem:[#allocation4]] %s3
  $region1: #{tpu_custom_call.1} parent=0
    #allocation5 [shape = 'u8[131072]{0}', space=vmem, size = 0x20000, scoped, tag = 'input window, operand 1']
    #allocation6 [shape = 's32[2]{0}', space=sflag, size = 0x8, scoped, tag = 'scoped memory for tpu_custom_call.1']
    #allocation7 [shape = 's32[2]{0}', space=sflag, size = 0x8, scoped, tag = 'scoped memory for tpu_custom_call.1']
    #allocation8 [shape = 'u8[8192]{0}', space=vmem, size = 0x2000, scoped, tag = 'output window, operand 0']
    %10 = vsyncpa [#allocation6], 0
    %s11 = scalar_lea.sflag [#allocation6], 1
    %12 = vsyncpa %s11, 0
    %13 = vsyncpa [#allocation7], 0
    %s14 = scalar_lea.sflag [#allocation7], 1
    %15 = vsyncpa %s14, 0
    loop: start=0, step=1, limit=4
    $region2: #{tpu_custom_call.1} parent=1 // loop_pre_header
      _
    $region3: #{tpu_custom_call.1} parent=1 // loop_header
      %s17 = sphi 0, %s21
      %p18 = scmp.ge.s32.totalorder %s17, 4
      %s24 = sphi 0, %s36
      %s25 = sphi 0, %s32
      %s26 = sphi 0, %s24
      %s27 = sphi 0, %s25
      %s28 = sphi 0, %s26
      %s29 = sphi 0, %s27
      %s39 = sphi 0, %s41
      %s42 = sphi 0, %s39
      %s43 = sphi 0, %s42
      %s59 = sphi 0, %s43
      %s67 = sphi 0, %s69
      %s70 = sphi 0, %s67
      %s71 = sphi 0, %s70
      %s87 = sphi 0, %s71
      %s91 = sphi 0, %s91
      %s93 = sphi 0, %s91
      %s94 = sphi 0, %s93
      %s108 = sphi 0, %s94
      %s112 = sphi 0, %s112
      %s114 = sphi 0, %s112
      %s115 = sphi 0, %s114
      %s129 = sphi 0, %s115
      %s135 = sphi 0, %s137
      %s138 = sphi 0, %s135
      %s139 = sphi 0, %s138
      %s155 = sphi 0, %s139
    $region4: #{tpu_custom_call.1} parent=1 // loop_header_branch
      %20 = sbr.rel (%p18) target = $region8
    $region5: #{tpu_custom_call.1} parent=1 // loop_body
      %s22 = ssub.s32 %s17, 1
      %s23 = ssub.s32 %s17, 2
      %s30 = sadd.s32 1, %s25
      %p31 = scmp.ge.s32.totalorder %s30, 1
      %s32 = scalar_select %p31, 0, %s30
      %s33 = sadd.s32 1, %s24
      %s34 = scalar_select %p31, %s33, %s24
      %p35 = scmp.ge.s32.totalorder %s34, 2
      %s36 = scalar_select %p35, 0, %s34
      %s37 = ssub.s32 %s24, %s36
      %p38 = scmp.eq.s32.totalorder %s37, 0
      %s40 = sadd.s32 %s39, 1
      %s41 = scalar_select %p38, %s39, %s40
      %p44 = pneg %p38
      %p45 = scmp.eq.s32.totalorder %s17, 1
      %p46 = por %p44, %p45
      %p47 = scmp.ne.s32.totalorder %s39, %s42
      %p48 = scmp.eq.s32.totalorder %s17, 0
      %p49 = por %p47, %p48
      %p50 = scmp.ne.s32.totalorder %s39, %s42
      %p51 = scmp.eq.s32.totalorder %s22, 1
      %p52 = por %p50, %p51
      %p53 = scmp.ne.s32.totalorder %s42, %s43
      %p54 = scmp.eq.s32.totalorder %s22, 0
      %p55 = por %p53, %p54
      %p56 = scmp.ne.s32.totalorder %s42, %s43
      %p57 = scmp.eq.s32.totalorder %s23, 1
      %p58 = por %p56, %p57
      %p60 = scmp.ne.s32.totalorder %s43, %s59
      %p61 = scmp.eq.s32.totalorder %s23, 0
      %p62 = por %p60, %p61
      %s63 = ssub.s32 %s24, %s36
      %s64 = ssub.s32 %s25, %s32
      %s65 = sor.u32 %s63, %s64
      %p66 = scmp.eq.s32.totalorder %s65, 0
      %s68 = sadd.s32 %s67, 1
      %s69 = scalar_select %p66, %s67, %s68
      %p72 = pneg %p66
      %p73 = scmp.eq.s32.totalorder %s17, 1
      %p74 = por %p72, %p73
      %p75 = scmp.ne.s32.totalorder %s67, %s70
      %p76 = scmp.eq.s32.totalorder %s17, 0
      %p77 = por %p75, %p76
      %p78 = scmp.ne.s32.totalorder %s67, %s70
      %p79 = scmp.eq.s32.totalorder %s22, 1
      %p80 = por %p78, %p79
      %p81 = scmp.ne.s32.totalorder %s70, %s71
      %p82 = scmp.eq.s32.totalorder %s22, 0
      %p83 = por %p81, %p82
      %p84 = scmp.ne.s32.totalorder %s70, %s71
      %p85 = scmp.eq.s32.totalorder %s23, 1
      %p86 = por %p84, %p85
      %p88 = scmp.ne.s32.totalorder %s71, %s87
      %p89 = scmp.eq.s32.totalorder %s23, 0
      %p90 = por %p88, %p89
      %s92 = sadd.s32 %s91, 1
      %p95 = scmp.eq.s32.totalorder %s17, 1
      %p96 = scmp.ne.s32.totalorder %s91, %s93
      %p97 = scmp.eq.s32.totalorder %s17, 0
      %p98 = por %p96, %p97
      %p99 = scmp.ne.s32.totalorder %s91, %s93
      %p100 = scmp.eq.s32.totalorder %s22, 1
      %p101 = por %p99, %p100
      %p102 = scmp.ne.s32.totalorder %s93, %s94
      %p103 = scmp.eq.s32.totalorder %s22, 0
      %p104 = por %p102, %p103
      %p105 = scmp.ne.s32.totalorder %s93, %s94
      %p106 = scmp.eq.s32.totalorder %s23, 1
      %p107 = por %p105, %p106
      %p109 = scmp.ne.s32.totalorder %s94, %s108
      %p110 = scmp.eq.s32.totalorder %s23, 0
      %p111 = por %p109, %p110
      %s113 = sadd.s32 %s112, 1
      %p116 = scmp.eq.s32.totalorder %s17, 1
      %p117 = scmp.ne.s32.totalorder %s112, %s114
      %p118 = scmp.eq.s32.totalorder %s17, 0
      %p119 = por %p117, %p118
      %p120 = scmp.ne.s32.totalorder %s112, %s114
      %p121 = scmp.eq.s32.totalorder %s22, 1
      %p122 = por %p120, %p121
      %p123 = scmp.ne.s32.totalorder %s114, %s115
      %p124 = scmp.eq.s32.totalorder %s22, 0
      %p125 = por %p123, %p124
      %p126 = scmp.ne.s32.totalorder %s114, %s115
      %p127 = scmp.eq.s32.totalorder %s23, 1
      %p128 = por %p126, %p127
      %p130 = scmp.ne.s32.totalorder %s115, %s129
      %p131 = scmp.eq.s32.totalorder %s23, 0
      %p132 = por %p130, %p131
      %s133 = ssub.s32 %s24, %s36
      %p134 = scmp.eq.s32.totalorder %s133, 0
      %s136 = sadd.s32 %s135, 1
      %s137 = scalar_select %p134, %s135, %s136
      %p140 = pneg %p134
      %p141 = scmp.eq.s32.totalorder %s17, 1
      %p142 = por %p140, %p141
      %p143 = scmp.ne.s32.totalorder %s135, %s138
      %p144 = scmp.eq.s32.totalorder %s17, 0
      %p145 = por %p143, %p144
      %p146 = scmp.ne.s32.totalorder %s135, %s138
      %p147 = scmp.eq.s32.totalorder %s22, 1
      %p148 = por %p146, %p147
      %p149 = scmp.ne.s32.totalorder %s138, %s139
      %p150 = scmp.eq.s32.totalorder %s22, 0
      %p151 = por %p149, %p150
      %p152 = scmp.ne.s32.totalorder %s138, %s139
      %p153 = scmp.eq.s32.totalorder %s23, 1
      %p154 = por %p152, %p153
      %p156 = scmp.ne.s32.totalorder %s139, %s155
      %p157 = scmp.eq.s32.totalorder %s23, 0
      %p158 = por %p156, %p157
      %p159 = scmp.le.s32.totalorder 1, %s17
      %p160 = scmp.lt.s32.totalorder %s17, 3
      %p161 = pnand %p159, %p160
      %p162 = pneg %p161
      // Predicated region
      $region9: #{tpu_custom_call.1} parent=5 // pred_check
        _
      $region10: #{tpu_custom_call.1} parent=5 // pred_check_branch
        %164 = sbr.rel (%p161) target = $region12
      $region11: #{tpu_custom_call.1} parent=5 // pred_region
        %s165 = ssub.s32 %s17, 1
        // Predicated region
        $region13: #{tpu_custom_call.1} parent=11 // pred_check
          %p166 = pneg %p104
        $region14: #{tpu_custom_call.1} parent=11 // pred_check_branch
          %168 = sbr.rel (%p166) target = $region16
        $region15: #{tpu_custom_call.1} parent=11 // pred_region
          _
        $region16: #{tpu_custom_call.1} parent=11 // pred_fallthru
          _
        // Predicated region
        $region17: #{tpu_custom_call.1} parent=11 // pred_check
          %p169 = pneg %p125
        $region18: #{tpu_custom_call.1} parent=11 // pred_check_branch
          %171 = sbr.rel (%p169) target = $region20
        $region19: #{tpu_custom_call.1} parent=11 // pred_region
          _
        $region20: #{tpu_custom_call.1} parent=11 // pred_fallthru
          _
      $region12: #{tpu_custom_call.1} parent=5 // pred_fallthru
        _
      %p172 = scmp.lt.s32.totalorder %s17, 2
      // Predicated region
      $region21: #{tpu_custom_call.1} parent=5 // pred_check
        %p173 = pneg %p172
      $region22: #{tpu_custom_call.1} parent=5 // pred_check_branch
        %175 = sbr.rel (%p173) target = $region24
      $region23: #{tpu_custom_call.1} parent=5 // pred_region
        // Predicated region
        $region25: #{tpu_custom_call.1} parent=23 // pred_check
          %p176 = pneg %p49
        $region26: #{tpu_custom_call.1} parent=23 // pred_check_branch
          %178 = sbr.rel (%p176) target = $region28
        $region27: #{tpu_custom_call.1} parent=23 // pred_region
          %p179 = scmp.lt.s32.totalorder %s24, 1
          %s180 = scalar_select %p179, %s24, 1
          %s181 = smul.addr %s180, 8
          %s182 = scalar_lea.vmem %s0, %s181
        $region28: #{tpu_custom_call.1} parent=23 // pred_fallthru
          _
        // Predicated region
        $region29: #{tpu_custom_call.1} parent=23 // pred_check
          %p183 = pneg %p77
        $region30: #{tpu_custom_call.1} parent=23 // pred_check_branch
          %185 = sbr.rel (%p183) target = $region32
        $region31: #{tpu_custom_call.1} parent=23 // pred_region
          %s186 = sand.u32 %s67, 1
          %s187 = scalar_lea.sflag [#allocation6], %s186
          %s188 = sand.u32 %s67, 1
          %s189 = smul.addr %s188, 128
          %s190 = scalar_lea.vmem [#allocation5], %s189
          %s191 = smul.u32 8, %s24
          %s192 = smul.u32 2, %s25
          %s194 = ssub.s32 2048, 2048
          %195 = vsyncadd %s187, %s194
          %s196 = smul.addr %s191, 2
          %s197 = sadd.s32 %s192, %s196
          %s198 = smul.addr %s197, 128
          %s199 = scalar_lea.hbm %s1, %s198
          %s200 = sshll.u32 %s190, 4
          %s201 = int_to_ptr.vmem [resolvable:$true] %s200
          %206 = dma.hbm_to_vmem [thread:$0]  %s199, 2048, %s201, %s187, 128, 128, 8
        $region32: #{tpu_custom_call.1} parent=23 // pred_fallthru
          _
      $region24: #{tpu_custom_call.1} parent=5 // pred_fallthru
        _
      %p207 = scmp.le.s32.totalorder 1, %s17
      %p208 = scmp.lt.s32.totalorder %s17, 3
      %p209 = pnand %p207, %p208
      %p210 = pneg %p209
      // Predicated region
      $region33: #{tpu_custom_call.1} parent=5 // pred_check
        _
      $region34: #{tpu_custom_call.1} parent=5 // pred_check_branch
        %212 = sbr.rel (%p209) target = $region36
      $region35: #{tpu_custom_call.1} parent=5 // pred_region
        %s213 = ssub.s32 %s17, 1
        %s214 = sand.u32 %s70, 1
        %s215 = scalar_lea.sflag [#allocation6], %s214
        %s216 = sand.u32 %s70, 1
        %s217 = smul.addr %s216, 128
        %s218 = scalar_lea.vmem [#allocation5], %s217
        // Predicated region
        $region37: #{tpu_custom_call.1} parent=35 // pred_check
          %p219 = pneg %p83
        $region38: #{tpu_custom_call.1} parent=35 // pred_check_branch
          %221 = sbr.rel (%p219) target = $region40
        $region39: #{tpu_custom_call.1} parent=35 // pred_region
          %222 = dma.done %s215, 2048
        $region40: #{tpu_custom_call.1} parent=35 // pred_fallthru
          _
        %p223 = scmp.lt.s32.totalorder %s26, 1
        %s224 = scalar_select %p223, %s26, 1
        %s225 = smul.addr %s224, 8
        %s226 = scalar_lea.vmem %s0, %s225
        %p227 = pneg %p55
        %p228 = pneg %p52
        %s229 = sand.u32 %s70, 1
        %s230 = scalar_lea.sflag [#allocation6], %s229
        %s231 = sand.u32 %s70, 1
        %s232 = smul.addr %s231, 128
        %s233 = scalar_lea.vmem [#allocation5], %s232
        %p234 = pneg %p83
        %p235 = pneg %p80
        %p236 = pneg %p104
        %p237 = pneg %p101
        %p238 = pneg %p125
        %p239 = pneg %p122
        %p240 = pneg %p151
        %p241 = pneg %p148
        %s242 = sand.u32 %s138, 1
        %s243 = scalar_lea.sflag [#allocation7], %s242
        %s244 = sand.u32 %s138, 1
        %s245 = smul.addr %s244, 8
        %s246 = scalar_lea.vmem [#allocation8], %s245
        %p247 = scmp.lt.s32.totalorder %s26, 1
        %s248 = scalar_select %p247, %s26, 1
        %s249 = smul.addr %s248, 8
        %s250 = scalar_lea.vmem %s0, %s249
        %s251 = smul.u32 8, %s26
        %s252 = smul.u32 2, %s27
        %p253 = scmp.eq.s32.totalorder %s27, 0
        // Predicated region
        $region41: #{tpu_custom_call.1} parent=35 // pred_check
          %p254 = pneg %p253
        $region42: #{tpu_custom_call.1} parent=35 // pred_check_branch
          %256 = sbr.rel (%p254) target = $region44
        $region43: #{tpu_custom_call.1} parent=35 // pred_region
          %vm257 = vcmask 261120
          %258 = vst.msk [vmem:[#allocation2] sm:$0xff] %vm257, 0.0
          %259 = vst.msk [vmem:[#allocation3] sm:$0xff] %vm257, -inf
        $region44: #{tpu_custom_call.1} parent=35 // pred_fallthru
          _
        %v260 = vld [vmem:[%s218] sm:$0xff]
        %v261 = vld [vmem:[%s218 + $0x8] sm:$0xff]
        %v262 = vld [vmem:[%s218 + $0x10] sm:$0xff]
        %v263 = vld [vmem:[%s218 + $0x18] sm:$0xff]
        %v264 = vld [vmem:[%s218 + $0x20] sm:$0xff]
        %v265 = vld [vmem:[%s218 + $0x28] sm:$0xff]
        %v266 = vld [vmem:[%s218 + $0x30] sm:$0xff]
        %v267 = vld [vmem:[%s218 + $0x38] sm:$0xff]
        %v268 = vld [vmem:[%s218 + $0x40] sm:$0xff]
        %v269 = vld [vmem:[%s218 + $0x48] sm:$0xff]
        %v270 = vld [vmem:[%s218 + $0x50] sm:$0xff]
        %v271 = vld [vmem:[%s218 + $0x58] sm:$0xff]
        %v272 = vld [vmem:[%s218 + $0x60] sm:$0xff]
        %v273 = vld [vmem:[%s218 + $0x68] sm:$0xff]
        %v274 = vld [vmem:[%s218 + $0x70] sm:$0xff]
        %v275 = vld [vmem:[%s218 + $0x78] sm:$0xff]
        %v276 = vld [vmem:[%s2] sm:$0x1]
        %s277 = sld [smem:[#allocation4]]
        %v279 = vlaneseq
        %v280 = vshrl.u32 %v279, 7
        %v281 = vsub.s32 0, %v280
        %v282 = vrot.slane %v276, %v281
        %v284 = vmul.f32 %v260, %v282
        %v285 = vmul.f32 %v261, %v282
        %v286 = vmul.f32 %v262, %v282
        %v287 = vmul.f32 %v263, %v282
        %v288 = vmul.f32 %v264, %v282
        %v289 = vmul.f32 %v265, %v282
        %v290 = vmul.f32 %v266, %v282
        %v291 = vmul.f32 %v267, %v282
        %v292 = vmul.f32 %v268, %v282
        %v293 = vmul.f32 %v269, %v282
        %v294 = vmul.f32 %v270, %v282
        %v295 = vmul.f32 %v271, %v282
        %v296 = vmul.f32 %v272, %v282
        %v297 = vmul.f32 %v273, %v282
        %v298 = vmul.f32 %v274, %v282
        %v299 = vmul.f32 %v275, %v282
        %vm300 = vcmask 261120
        %v301 = vsel %vm300, %v284, 0.0
        %302 = vadd.xlane.f32.xlu0 %v301
        %v303 = vpop.xlane.xlu0 %302
        %v304 = vsel %vm300, %v285, 0.0
        %305 = vadd.xlane.f32.xlu0 %v304
        %v306 = vpop.xlane.xlu0 %305
        %v307 = vsel %vm300, %v286, 0.0
        %308 = vadd.xlane.f32.xlu0 %v307
        %v309 = vpop.xlane.xlu0 %308
        %v310 = vsel %vm300, %v287, 0.0
        %311 = vadd.xlane.f32.xlu0 %v310
        %v312 = vpop.xlane.xlu0 %311
        %v313 = vsel %vm300, %v288, 0.0
        %314 = vadd.xlane.f32.xlu0 %v313
        %v315 = vpop.xlane.xlu0 %314
        %v316 = vsel %vm300, %v289, 0.0
        %317 = vadd.xlane.f32.xlu0 %v316
        %v318 = vpop.xlane.xlu0 %317
        %v319 = vsel %vm300, %v290, 0.0
        %320 = vadd.xlane.f32.xlu0 %v319
        %v321 = vpop.xlane.xlu0 %320
        %v322 = vsel %vm300, %v291, 0.0
        %323 = vadd.xlane.f32.xlu0 %v322
        %v324 = vpop.xlane.xlu0 %323
        %v325 = vsel %vm300, %v292, 0.0
        %326 = vadd.xlane.f32.xlu0 %v325
        %v327 = vpop.xlane.xlu0 %326
        %v328 = vsel %vm300, %v293, 0.0
        %329 = vadd.xlane.f32.xlu0 %v328
        %v330 = vpop.xlane.xlu0 %329
        %v331 = vsel %vm300, %v294, 0.0
        %332 = vadd.xlane.f32.xlu0 %v331
        %v333 = vpop.xlane.xlu0 %332
        %v334 = vsel %vm300, %v295, 0.0
        %335 = vadd.xlane.f32.xlu0 %v334
        %v336 = vpop.xlane.xlu0 %335
        %v337 = vsel %vm300, %v296, 0.0
        %338 = vadd.xlane.f32.xlu0 %v337
        %v339 = vpop.xlane.xlu0 %338
        %v340 = vsel %vm300, %v297, 0.0
        %341 = vadd.xlane.f32.xlu0 %v340
        %v342 = vpop.xlane.xlu0 %341
        %v343 = vsel %vm300, %v298, 0.0
        %344 = vadd.xlane.f32.xlu0 %v343
        %v345 = vpop.xlane.xlu0 %344
        %v346 = vsel %vm300, %v299, 0.0
        %347 = vadd.xlane.f32.xlu0 %v346
        %v348 = vpop.xlane.xlu0 %347
        %v349 = vstv %s277
        %v350 = vadd.f32 %v303, %v349
        %v351 = vadd.f32 %v306, %v349
        %v352 = vadd.f32 %v309, %v349
        %v353 = vadd.f32 %v312, %v349
        %v354 = vadd.f32 %v315, %v349
        %v355 = vadd.f32 %v318, %v349
        %v356 = vadd.f32 %v321, %v349
        %v357 = vadd.f32 %v324, %v349
        %v358 = vadd.f32 %v327, %v349
        %v359 = vadd.f32 %v330, %v349
        %v360 = vadd.f32 %v333, %v349
        %v361 = vadd.f32 %v336, %v349
        %v362 = vadd.f32 %v339, %v349
        %v363 = vadd.f32 %v342, %v349
        %v364 = vadd.f32 %v345, %v349
        %v365 = vadd.f32 %v348, %v349
        %v366 = vtanh.pop %v350
        %v367 = vtanh.pop %v351
        %v368 = vtanh.pop %v352
        %v369 = vtanh.pop %v353
        %v370 = vtanh.pop %v354
        %v371 = vtanh.pop %v355
        %v372 = vtanh.pop %v356
        %v373 = vtanh.pop %v357
        %v374 = vtanh.pop %v358
        %v375 = vtanh.pop %v359
        %v376 = vtanh.pop %v360
        %v377 = vtanh.pop %v361
        %v378 = vtanh.pop %v362
        %v379 = vtanh.pop %v363
        %v380 = vtanh.pop %v364
        %v381 = vtanh.pop %v365
        %v382 = vld [vmem:[%s250] sm:$0xff]
        %v383 = vlaneseq
        %v384 = vshrl.u32 %v383, 7
        %v385 = vadd.s32 %v384, 8
        %s386 = smul.u32 %s27, 16
        %v387 = vstv %s386
        %v388 = vadd.s32 %v384, %v387
        %v389 = vadd.s32 %v385, %v387
        %v390 = vcombine.high %v382, %v382
        %v392 = vunpack.c.l.s4 1966171168
        %v393 = vunpack.c.0.s8 %v392
        %v394 = vlaneseq
        %v395 = vshrl.u32 %v394, 7
        %v396 = vsub.s32 %v393, %v395
        %v397 = vrot.slane %v382, %v396
        %v399 = vunpack.c.l.s4 1966171168
        %v400 = vunpack.c.0.s8 %v399
        %v401 = vlaneseq
        %v402 = vshrl.u32 %v401, 7
        %v403 = vsub.s32 %v400, %v402
        %v404 = vrot.slane %v390, %v403
        %v405 = vcombine.high %v397, %v397
        %v406 = vcombine.high %v404, %v404
        %v408 = vunpack.c.l.s4 1966171168
        %v409 = vunpack.c.0.s8 %v408
        %v410 = vlaneseq
        %v411 = vshrl.u32 %v410, 7
        %v412 = vsub.s32 %v409, %v411
        %v413 = vrot.slane %v397, %v412
        %v415 = vunpack.c.l.s4 1966171168
        %v416 = vunpack.c.0.s8 %v415
        %v417 = vlaneseq
        %v418 = vshrl.u32 %v417, 7
        %v419 = vsub.s32 %v416, %v418
        %v420 = vrot.slane %v404, %v419
        %v422 = vunpack.c.l.s4 1966171168
        %v423 = vunpack.c.0.s8 %v422
        %v424 = vlaneseq
        %v425 = vshrl.u32 %v424, 7
        %v426 = vsub.s32 %v423, %v425
        %v427 = vrot.slane %v405, %v426
        %v429 = vunpack.c.l.s4 1966171168
        %v430 = vunpack.c.0.s8 %v429
        %v431 = vlaneseq
        %v432 = vshrl.u32 %v431, 7
        %v433 = vsub.s32 %v430, %v432
        %v434 = vrot.slane %v406, %v433
        %v435 = vcombine.high %v413, %v413
        %v436 = vcombine.high %v420, %v420
        %v437 = vcombine.high %v427, %v427
        %v438 = vcombine.high %v434, %v434
        %v439 = vlaneseq
        %v440 = vshrl.u32 %v439, 7
        %v441 = vsub.s32 0, %v440
        %v442 = vrot.slane %v413, %v441
        %v443 = vlaneseq
        %v444 = vshrl.u32 %v443, 7
        %v445 = vsub.s32 0, %v444
        %v446 = vrot.slane %v427, %v445
        %v447 = vlaneseq
        %v448 = vshrl.u32 %v447, 7
        %v449 = vsub.s32 0, %v448
        %v450 = vrot.slane %v435, %v449
        %v451 = vlaneseq
        %v452 = vshrl.u32 %v451, 7
        %v453 = vsub.s32 0, %v452
        %v454 = vrot.slane %v437, %v453
        %v455 = vlaneseq
        %v456 = vshrl.u32 %v455, 7
        %v457 = vsub.s32 0, %v456
        %v458 = vrot.slane %v420, %v457
        %v459 = vlaneseq
        %v460 = vshrl.u32 %v459, 7
        %v461 = vsub.s32 0, %v460
        %v462 = vrot.slane %v434, %v461
        %v463 = vlaneseq
        %v464 = vshrl.u32 %v463, 7
        %v465 = vsub.s32 0, %v464
        %v466 = vrot.slane %v436, %v465
        %v467 = vlaneseq
        %v468 = vshrl.u32 %v467, 7
        %v469 = vsub.s32 0, %v468
        %v470 = vrot.slane %v438, %v469
        %vm471 = vcmp.lt.s32.totalorder %v388, %v442
        %vm472 = vcmp.lt.s32.totalorder %v389, %v442
        %vm473 = vcmp.lt.s32.totalorder %v388, %v446
        %vm474 = vcmp.lt.s32.totalorder %v389, %v446
        %vm475 = vcmp.lt.s32.totalorder %v388, %v450
        %vm476 = vcmp.lt.s32.totalorder %v389, %v450
        %vm477 = vcmp.lt.s32.totalorder %v388, %v454
        %vm478 = vcmp.lt.s32.totalorder %v389, %v454
        %vm479 = vcmp.lt.s32.totalorder %v388, %v458
        %vm480 = vcmp.lt.s32.totalorder %v389, %v458
        %vm481 = vcmp.lt.s32.totalorder %v388, %v462
        %vm482 = vcmp.lt.s32.totalorder %v389, %v462
        %vm483 = vcmp.lt.s32.totalorder %v388, %v466
        %vm484 = vcmp.lt.s32.totalorder %v389, %v466
        %vm485 = vcmp.lt.s32.totalorder %v388, %v470
        %vm486 = vcmp.lt.s32.totalorder %v389, %v470
        %v487 = vmul.f32 %v260, %v366
        %v488 = vmul.f32 %v261, %v367
        %v489 = vmul.f32 %v262, %v368
        %v490 = vmul.f32 %v263, %v369
        %v491 = vmul.f32 %v264, %v370
        %v492 = vmul.f32 %v265, %v371
        %v493 = vmul.f32 %v266, %v372
        %v494 = vmul.f32 %v267, %v373
        %v495 = vmul.f32 %v268, %v374
        %v496 = vmul.f32 %v269, %v375
        %v497 = vmul.f32 %v270, %v376
        %v498 = vmul.f32 %v271, %v377
        %v499 = vmul.f32 %v272, %v378
        %v500 = vmul.f32 %v273, %v379
        %v501 = vmul.f32 %v274, %v380
        %v502 = vmul.f32 %v275, %v381
        %v503 = vsel %vm471, 1, 0
        %v504 = vsel %vm472, 1, 0
        %v505 = vsel %vm473, 1, 0
        %v506 = vsel %vm474, 1, 0
        %v507 = vsel %vm475, 1, 0
        %v508 = vsel %vm476, 1, 0
        %v509 = vsel %vm477, 1, 0
        %v510 = vsel %vm478, 1, 0
        %v511 = vsel %vm479, 1, 0
        %v512 = vsel %vm480, 1, 0
        %v513 = vsel %vm481, 1, 0
        %v514 = vsel %vm482, 1, 0
        %v515 = vsel %vm483, 1, 0
        %v516 = vsel %vm484, 1, 0
        %v517 = vsel %vm485, 1, 0
        %v518 = vsel %vm486, 1, 0
        %519 = vset.pattern.permute.xlu0 0
        %520 = vperm.xlu0 %519, %v503
        %v521 = vpop.permute.xlu0 %520
        %522 = vset.pattern.permute.xlu0 0
        %523 = vperm.xlu0 %522, %v504
        %v524 = vpop.permute.xlu0 %523
        %525 = vset.pattern.permute.xlu0 0
        %526 = vperm.xlu0 %525, %v505
        %v527 = vpop.permute.xlu0 %526
        %528 = vset.pattern.permute.xlu0 0
        %529 = vperm.xlu0 %528, %v506
        %v530 = vpop.permute.xlu0 %529
        %531 = vset.pattern.permute.xlu0 0
        %532 = vperm.xlu0 %531, %v507
        %v533 = vpop.permute.xlu0 %532
        %534 = vset.pattern.permute.xlu0 0
        %535 = vperm.xlu0 %534, %v508
        %v536 = vpop.permute.xlu0 %535
        %537 = vset.pattern.permute.xlu0 0
        %538 = vperm.xlu0 %537, %v509
        %v539 = vpop.permute.xlu0 %538
        %540 = vset.pattern.permute.xlu0 0
        %541 = vperm.xlu0 %540, %v510
        %v542 = vpop.permute.xlu0 %541
        %543 = vset.pattern.permute.xlu0 0
        %544 = vperm.xlu0 %543, %v511
        %v545 = vpop.permute.xlu0 %544
        %546 = vset.pattern.permute.xlu0 0
        %547 = vperm.xlu0 %546, %v512
        %v548 = vpop.permute.xlu0 %547
        %549 = vset.pattern.permute.xlu0 0
        %550 = vperm.xlu0 %549, %v513
        %v551 = vpop.permute.xlu0 %550
        %552 = vset.pattern.permute.xlu0 0
        %553 = vperm.xlu0 %552, %v514
        %v554 = vpop.permute.xlu0 %553
        %555 = vset.pattern.permute.xlu0 0
        %556 = vperm.xlu0 %555, %v515
        %v557 = vpop.permute.xlu0 %556
        %558 = vset.pattern.permute.xlu0 0
        %559 = vperm.xlu0 %558, %v516
        %v560 = vpop.permute.xlu0 %559
        %561 = vset.pattern.permute.xlu0 0
        %562 = vperm.xlu0 %561, %v517
        %v563 = vpop.permute.xlu0 %562
        %564 = vset.pattern.permute.xlu0 0
        %565 = vperm.xlu0 %564, %v518
        %v566 = vpop.permute.xlu0 %565
        %vm567 = vcmp.eq.s32.totalorder %v521, 1
        %vm568 = vcmp.eq.s32.totalorder %v524, 1
        %vm569 = vcmp.eq.s32.totalorder %v527, 1
        %vm570 = vcmp.eq.s32.totalorder %v530, 1
        %vm571 = vcmp.eq.s32.totalorder %v533, 1
        %vm572 = vcmp.eq.s32.totalorder %v536, 1
        %vm573 = vcmp.eq.s32.totalorder %v539, 1
        %vm574 = vcmp.eq.s32.totalorder %v542, 1
        %vm575 = vcmp.eq.s32.totalorder %v545, 1
        %vm576 = vcmp.eq.s32.totalorder %v548, 1
        %vm577 = vcmp.eq.s32.totalorder %v551, 1
        %vm578 = vcmp.eq.s32.totalorder %v554, 1
        %vm579 = vcmp.eq.s32.totalorder %v557, 1
        %vm580 = vcmp.eq.s32.totalorder %v560, 1
        %vm581 = vcmp.eq.s32.totalorder %v563, 1
        %vm582 = vcmp.eq.s32.totalorder %v566, 1
        %v583 = vsel %vm567, %v487, 0.0
        %v584 = vsel %vm568, %v488, 0.0
        %v585 = vsel %vm569, %v489, 0.0
        %v586 = vsel %vm570, %v490, 0.0
        %v587 = vsel %vm571, %v491, 0.0
        %v588 = vsel %vm572, %v492, 0.0
        %v589 = vsel %vm573, %v493, 0.0
        %v590 = vsel %vm574, %v494, 0.0
        %v591 = vsel %vm575, %v495, 0.0
        %v592 = vsel %vm576, %v496, 0.0
        %v593 = vsel %vm577, %v497, 0.0
        %v594 = vsel %vm578, %v498, 0.0
        %v595 = vsel %vm579, %v499, 0.0
        %v596 = vsel %vm580, %v500, 0.0
        %v597 = vsel %vm581, %v501, 0.0
        %v598 = vsel %vm582, %v502, 0.0
        %v599 = vld [vmem:[#allocation2] sm:$0xff]
        %v600 = vsel %vm300, %v583, 0.0
        %v601 = vsel %vm300, %v584, 0.0
        %v602 = vadd.f32 %v600, %v601
        %v603 = vrot.slane %v602, 4
        %v604 = vadd.f32 %v602, %v603
        %v605 = vrot.slane %v604, 2
        %v606 = vadd.f32 %v604, %v605
        %v607 = vrot.slane %v606, 1
        %v608 = vadd.f32 %v606, %v607
        %v609 = vsel %vm300, %v585, 0.0
        %v610 = vsel %vm300, %v586, 0.0
        %v611 = vadd.f32 %v609, %v610
        %v612 = vrot.slane %v611, 4
        %v613 = vadd.f32 %v611, %v612
        %v614 = vrot.slane %v613, 2
        %v615 = vadd.f32 %v613, %v614
        %v616 = vrot.slane %v615, 1
        %v617 = vadd.f32 %v615, %v616
        %v618 = vsel %vm300, %v587, 0.0
        %v619 = vsel %vm300, %v588, 0.0
        %v620 = vadd.f32 %v618, %v619
        %v621 = vrot.slane %v620, 4
        %v622 = vadd.f32 %v620, %v621
        %v623 = vrot.slane %v622, 2
        %v624 = vadd.f32 %v622, %v623
        %v625 = vrot.slane %v624, 1
        %v626 = vadd.f32 %v624, %v625
        %v627 = vsel %vm300, %v589, 0.0
        %v628 = vsel %vm300, %v590, 0.0
        %v629 = vadd.f32 %v627, %v628
        %v630 = vrot.slane %v629, 4
        %v631 = vadd.f32 %v629, %v630
        %v632 = vrot.slane %v631, 2
        %v633 = vadd.f32 %v631, %v632
        %v634 = vrot.slane %v633, 1
        %v635 = vadd.f32 %v633, %v634
        %v636 = vsel %vm300, %v591, 0.0
        %v637 = vsel %vm300, %v592, 0.0
        %v638 = vadd.f32 %v636, %v637
        %v639 = vrot.slane %v638, 4
        %v640 = vadd.f32 %v638, %v639
        %v641 = vrot.slane %v640, 2
        %v642 = vadd.f32 %v640, %v641
        %v643 = vrot.slane %v642, 1
        %v644 = vadd.f32 %v642, %v643
        %v645 = vsel %vm300, %v593, 0.0
        %v646 = vsel %vm300, %v594, 0.0
        %v647 = vadd.f32 %v645, %v646
        %v648 = vrot.slane %v647, 4
        %v649 = vadd.f32 %v647, %v648
        %v650 = vrot.slane %v649, 2
        %v651 = vadd.f32 %v649, %v650
        %v652 = vrot.slane %v651, 1
        %v653 = vadd.f32 %v651, %v652
        %v654 = vsel %vm300, %v595, 0.0
        %v655 = vsel %vm300, %v596, 0.0
        %v656 = vadd.f32 %v654, %v655
        %v657 = vrot.slane %v656, 4
        %v658 = vadd.f32 %v656, %v657
        %v659 = vrot.slane %v658, 2
        %v660 = vadd.f32 %v658, %v659
        %v661 = vrot.slane %v660, 1
        %v662 = vadd.f32 %v660, %v661
        %v663 = vsel %vm300, %v597, 0.0
        %v664 = vsel %vm300, %v598, 0.0
        %v665 = vadd.f32 %v663, %v664
        %v666 = vrot.slane %v665, 4
        %v667 = vadd.f32 %v665, %v666
        %v668 = vrot.slane %v667, 2
        %v669 = vadd.f32 %v667, %v668
        %v670 = vrot.slane %v669, 1
        %v671 = vadd.f32 %v669, %v670
        %vm680 = vcmask 1041409
        %v681 = vsel %vm680, %v617, %v608
        %vm682 = vcmask 1042434
        %v683 = vsel %vm682, %v626, %v681
        %vm684 = vcmask 1043459
        %v685 = vsel %vm684, %v635, %v683
        %vm686 = vcmask 1044484
        %v687 = vsel %vm686, %v644, %v685
        %vm688 = vcmask 1045509
        %v689 = vsel %vm688, %v653, %v687
        %vm690 = vcmask 1046534
        %v691 = vsel %vm690, %v662, %v689
        %vm692 = vcmask 1047559
        %v693 = vsel %vm692, %v671, %v691
        %v695 = vadd.f32 %v599, %v693
        %696 = vst.msk [vmem:[#allocation2] sm:$0xff] %vm300, %v695
        %v697 = vsel %vm567, %v260, -inf
        %v698 = vsel %vm568, %v261, -inf
        %v699 = vsel %vm569, %v262, -inf
        %v700 = vsel %vm570, %v263, -inf
        %v701 = vsel %vm571, %v264, -inf
        %v702 = vsel %vm572, %v265, -inf
        %v703 = vsel %vm573, %v266, -inf
        %v704 = vsel %vm574, %v267, -inf
        %v705 = vsel %vm575, %v268, -inf
        %v706 = vsel %vm576, %v269, -inf
        %v707 = vsel %vm577, %v270, -inf
        %v708 = vsel %vm578, %v271, -inf
        %v709 = vsel %vm579, %v272, -inf
        %v710 = vsel %vm580, %v273, -inf
        %v711 = vsel %vm581, %v274, -inf
        %v712 = vsel %vm582, %v275, -inf
        %v713 = vld [vmem:[#allocation3] sm:$0xff]
        %v714 = vsel %vm300, %v697, -inf
        %v715 = vsel %vm300, %v698, -inf
        %v716 = vmax.f32 %v714, %v715
        %v717 = vrot.slane %v716, 4
        %v718 = vmax.f32 %v716, %v717
        %v719 = vrot.slane %v718, 2
        %v720 = vmax.f32 %v718, %v719
        %v721 = vrot.slane %v720, 1
        %v722 = vmax.f32 %v720, %v721
        %v723 = vsel %vm300, %v699, -inf
        %v724 = vsel %vm300, %v700, -inf
        %v725 = vmax.f32 %v723, %v724
        %v726 = vrot.slane %v725, 4
        %v727 = vmax.f32 %v725, %v726
        %v728 = vrot.slane %v727, 2
        %v729 = vmax.f32 %v727, %v728
        %v730 = vrot.slane %v729, 1
        %v731 = vmax.f32 %v729, %v730
        %v732 = vsel %vm300, %v701, -inf
        %v733 = vsel %vm300, %v702, -inf
        %v734 = vmax.f32 %v732, %v733
        %v735 = vrot.slane %v734, 4
        %v736 = vmax.f32 %v734, %v735
        %v737 = vrot.slane %v736, 2
        %v738 = vmax.f32 %v736, %v737
        %v739 = vrot.slane %v738, 1
        %v740 = vmax.f32 %v738, %v739
        %v741 = vsel %vm300, %v703, -inf
        %v742 = vsel %vm300, %v704, -inf
        %v743 = vmax.f32 %v741, %v742
        %v744 = vrot.slane %v743, 4
        %v745 = vmax.f32 %v743, %v744
        %v746 = vrot.slane %v745, 2
        %v747 = vmax.f32 %v745, %v746
        %v748 = vrot.slane %v747, 1
        %v749 = vmax.f32 %v747, %v748
        %v750 = vsel %vm300, %v705, -inf
        %v751 = vsel %vm300, %v706, -inf
        %v752 = vmax.f32 %v750, %v751
        %v753 = vrot.slane %v752, 4
        %v754 = vmax.f32 %v752, %v753
        %v755 = vrot.slane %v754, 2
        %v756 = vmax.f32 %v754, %v755
        %v757 = vrot.slane %v756, 1
        %v758 = vmax.f32 %v756, %v757
        %v759 = vsel %vm300, %v707, -inf
        %v760 = vsel %vm300, %v708, -inf
        %v761 = vmax.f32 %v759, %v760
        %v762 = vrot.slane %v761, 4
        %v763 = vmax.f32 %v761, %v762
        %v764 = vrot.slane %v763, 2
        %v765 = vmax.f32 %v763, %v764
        %v766 = vrot.slane %v765, 1
        %v767 = vmax.f32 %v765, %v766
        %v768 = vsel %vm300, %v709, -inf
        %v769 = vsel %vm300, %v710, -inf
        %v770 = vmax.f32 %v768, %v769
        %v771 = vrot.slane %v770, 4
        %v772 = vmax.f32 %v770, %v771
        %v773 = vrot.slane %v772, 2
        %v774 = vmax.f32 %v772, %v773
        %v775 = vrot.slane %v774, 1
        %v776 = vmax.f32 %v774, %v775
        %v777 = vsel %vm300, %v711, -inf
        %v778 = vsel %vm300, %v712, -inf
        %v779 = vmax.f32 %v777, %v778
        %v780 = vrot.slane %v779, 4
        %v781 = vmax.f32 %v779, %v780
        %v782 = vrot.slane %v781, 2
        %v783 = vmax.f32 %v781, %v782
        %v784 = vrot.slane %v783, 1
        %v785 = vmax.f32 %v783, %v784
        %v794 = vsel %vm680, %v731, %v722
        %v795 = vsel %vm682, %v740, %v794
        %v796 = vsel %vm684, %v749, %v795
        %v797 = vsel %vm686, %v758, %v796
        %v798 = vsel %vm688, %v767, %v797
        %v799 = vsel %vm690, %v776, %v798
        %v800 = vsel %vm692, %v785, %v799
        %v802 = vmax.f32 %v713, %v800
        %803 = vst.msk [vmem:[#allocation3] sm:$0xff] %vm300, %v802
        // Predicated region
        $region45: #{tpu_custom_call.1} parent=35 // pred_check
          %p804 = pneg %p253
        $region46: #{tpu_custom_call.1} parent=35 // pred_check_branch
          %806 = sbr.rel (%p804) target = $region48
        $region47: #{tpu_custom_call.1} parent=35 // pred_region
          %vm807 = vcmp.gt.s32.totalorder %v382, 0
          %v808 = vld [vmem:[#allocation3] sm:$0xff]
          %v809 = vsel %vm807, 1, 0
          %810 = vset.pattern.permute.xlu0 0
          %811 = vperm.xlu0 %810, %v809
          %v812 = vpop.permute.xlu0 %811
          %vm813 = vcmp.eq.s32.totalorder %v812, 1
          %v814 = vsel %vm813, %v808, 0.0
          %v815 = vld [vmem:[#allocation2] sm:$0xff]
          %817 = vrot.lane.b32.xlu0 %v814, 32
          %v818 = vpop.permute.xlu0 %817
          %v820 = vsel %vm300, %v815, %v818
          %vm821 = vcmask 523264
          %822 = vst.msk [vmem:[%s246] sm:$0xff] %vm821, %v820
        $region48: #{tpu_custom_call.1} parent=35 // pred_fallthru
          _
        %s823 = sand.u32 %s138, 1
        %s824 = scalar_lea.sflag [#allocation7], %s823
        %s825 = sand.u32 %s138, 1
        %s826 = smul.addr %s825, 8
        %s827 = scalar_lea.vmem [#allocation8], %s826
        // Predicated region
        $region49: #{tpu_custom_call.1} parent=35 // pred_check
          %p828 = pneg %p148
        $region50: #{tpu_custom_call.1} parent=35 // pred_check_branch
          %830 = sbr.rel (%p828) target = $region52
        $region51: #{tpu_custom_call.1} parent=35 // pred_region
          %s832 = ssub.s32 128, 128
          %833 = vsyncadd %s824, %s832
          %s834 = smul.addr %s26, 128
          %s835 = scalar_lea.hbm %s4, %s834
          %s837 = sshll.u32 %s827, 4
          %s838 = int_to_ptr.vmem [resolvable:$true] %s837
          %840 = dma.vmem_to_hbm [thread:$0]  %s838, 128, %s835, %s824
        $region52: #{tpu_custom_call.1} parent=35 // pred_fallthru
          _
      $region36: #{tpu_custom_call.1} parent=5 // pred_fallthru
        _
      %p841 = scmp.le.s32.totalorder 2, %s17
      // Predicated region
      $region53: #{tpu_custom_call.1} parent=5 // pred_check
        %p842 = pneg %p841
      $region54: #{tpu_custom_call.1} parent=5 // pred_check_branch
        %844 = sbr.rel (%p842) target = $region56
      $region55: #{tpu_custom_call.1} parent=5 // pred_region
        %s845 = ssub.s32 %s17, 2
        // Predicated region
        $region57: #{tpu_custom_call.1} parent=55 // pred_check
          %p846 = pneg %p154
        $region58: #{tpu_custom_call.1} parent=55 // pred_check_branch
          %848 = sbr.rel (%p846) target = $region60
        $region59: #{tpu_custom_call.1} parent=55 // pred_region
          %s849 = sand.u32 %s139, 1
          %s850 = scalar_lea.sflag [#allocation7], %s849
          %s851 = sand.u32 %s139, 1
          %s852 = smul.addr %s851, 8
          %s853 = scalar_lea.vmem [#allocation8], %s852
          %854 = dma.done %s850, 128
        $region60: #{tpu_custom_call.1} parent=55 // pred_fallthru
          _
      $region56: #{tpu_custom_call.1} parent=5 // pred_fallthru
        _
    $region6: #{tpu_custom_call.1} parent=1 // loop_footer
      %s21 = sadd.s32 1, %s17
    $region7: #{tpu_custom_call.1} parent=1 // loop_footer_branch
      %16 = sbr.rel target = $region3
    $region8: #{tpu_custom_call.1} parent=1 // loop_exit
      _
    %855 = vsyncpa [#allocation6], 1
    %s856 = scalar_lea.sflag [#allocation6], 1
    %857 = vsyncpa %s856, 1
    %858 = vsyncpa [#allocation7], 1
    %s859 = scalar_lea.sflag [#allocation7], 1
    %860 = vsyncpa %s859, 1

</llo_original>
